<compile_context>
chip_gen: v5e
topology: v5e:2x2
jax: 0.10.0
libtpu: 0.0.40
codegen_flags: <defaults>
</compile_context>

<pallas_src>
import functools

import jax
import jax.numpy as jnp
from jax.experimental import pallas as pl
from jax.experimental.pallas import tpu as pltpu

IN_DIM = 3 * 8 * 8   # 192
HID = 300            # logical hidden size (PyTorch)
HID_PAD = 384        # 3 * 128, zero-padded hidden size used inside the kernel
OUT = 9


def _round_up(n, m):
    return ((n + m - 1) // m) * m


def net_kernel(x_ref, w1_ref, b1_ref, w2_ref, b2_ref, o_ref):
    # fc1: bf16 operands on the MXU, f32 accumulation.
    xb = x_ref[...].astype(jnp.bfloat16)
    h = jnp.dot(xb, w1_ref[...], preferred_element_type=jnp.float32)
    h = h + b1_ref[...]                 # (1, HID_PAD) broadcasts over the batch tile
    h = jnp.maximum(h, 0.0)

    # F.dropout(p=0.5, training=self.training): eval mode -> identity.
    # TODO(synk): training-mode dropout (pltpu.prng_seed + pltpu.prng_random_bits mask).

    # fc2: bf16 operands, f32 accumulation.
    logits = jnp.dot(h.astype(jnp.bfloat16), w2_ref[...],
                     preferred_element_type=jnp.float32)
    logits = logits + b2_ref[...]       # (1, OUT) broadcast

    # log_softmax over dim=1 (numerically stable, f32 throughout).
    m = jnp.max(logits, axis=1, keepdims=True)
    z = logits - m
    lse = jnp.log(jnp.sum(jnp.exp(z), axis=1, keepdims=True))
    o_ref[...] = z - lse


def prepare_params(w1, b1, w2, b2):
    """One-time param prep (call at init, not per forward): pad 300->384 and
    cast the matmul weights to bf16. Biases stay f32 (added post-accumulation)."""
    w1 = jnp.asarray(w1, jnp.float32).reshape(IN_DIM, HID)
    b1 = jnp.asarray(b1, jnp.float32).reshape(1, HID)
    w2 = jnp.asarray(w2, jnp.float32).reshape(HID, OUT)
    b2 = jnp.asarray(b2, jnp.float32).reshape(1, OUT)

    w1p = jnp.zeros((IN_DIM, HID_PAD), jnp.bfloat16).at[:, :HID].set(
        w1.astype(jnp.bfloat16))
    b1p = jnp.zeros((1, HID_PAD), jnp.float32).at[:, :HID].set(b1)
    w2p = jnp.zeros((HID_PAD, OUT), jnp.bfloat16).at[:HID, :].set(
        w2.astype(jnp.bfloat16))
    return w1p, b1p, w2p, b2


@functools.partial(jax.jit, static_argnames=("tb",))
def net_forward(x, w1p, b1p, w2p, b2, *, tb=2048):
    """x: (B, 192) f32; w1p: (192, 384) bf16; b1p: (1, 384) f32;
    w2p: (384, 9) bf16; b2: (1, 9) f32.  Use prepare_params() to build the
    padded/cast weights once."""
    B = x.shape[0]

    # --- batch tiling -------------------------------------------------------
    # Derive TB from B (not the other way around) so row padding is tiny, and
    # force >= 2 (even) tiles when B >= 16 so the "parallel" grid axis can use
    # both v7x TensorCores.
    n_tiles = max(1, pl.cdiv(B, tb))
    if B >= 16:
        n_tiles = max(n_tiles, 2)
    if n_tiles > 1 and n_tiles % 2:
        n_tiles += 1
    TB = max(8, _round_up(pl.cdiv(B, n_tiles), 8))
    Bp = n_tiles * TB
    if Bp != B:
        x = jnp.zeros((Bp, IN_DIM), x.dtype).at[:B, :].set(x)
    grid = (n_tiles,)

    # --- VMEM budget --------------------------------------------------------
    # Streamed tiles (double-buffered): x f32 + out (lane-padded to 128) f32.
    # Temporaries: h f32, h bf16, x bf16. Resident: bf16 weights + f32 biases.
    vmem_bytes = (
        2 * TB * IN_DIM * 4 + 2 * TB * 128 * 4
        + TB * HID_PAD * 4 + TB * HID_PAD * 2 + TB * IN_DIM * 2
        + IN_DIM * HID_PAD * 2 + HID_PAD * 4 + HID_PAD * 128 * 2 + 128 * 4
    )
    vmem_bytes = int(min(max(vmem_bytes + (2 << 20), 4 << 20), 32 << 20))

    cost = pl.CostEstimate(
        flops=2 * Bp * (IN_DIM * HID_PAD + HID_PAD * OUT),
        transcendentals=Bp * OUT,
        bytes_accessed=(4 * Bp * IN_DIM + 4 * Bp * OUT
                        + 2 * IN_DIM * HID_PAD + 4 * HID_PAD
                        + 2 * HID_PAD * OUT + 4 * OUT),
    )

    out = pl.pallas_call(
        net_kernel,
        out_shape=jax.ShapeDtypeStruct((Bp, OUT), jnp.float32),
        grid=grid,
        in_specs=[
            # x: streamed per batch tile (f32 in HBM, cast to bf16 in-kernel).
            pl.BlockSpec((TB, IN_DIM), lambda i: (i, 0)),
            # weights/biases: constant index_map -> VMEM-resident across tiles.
            pl.BlockSpec((IN_DIM, HID_PAD), lambda i: (0, 0)),
            pl.BlockSpec((1, HID_PAD), lambda i: (0, 0)),
            pl.BlockSpec((HID_PAD, OUT), lambda i: (0, 0)),
            pl.BlockSpec((1, OUT), lambda i: (0, 0)),
        ],
        out_specs=pl.BlockSpec((TB, OUT), lambda i: (i, 0)),
        compiler_params=pltpu.CompilerParams(
            dimension_semantics=("parallel",),   # shards batch tiles across v7x's 2 TCs
            vmem_limit_bytes=vmem_bytes,
        ),
        cost_estimate=cost,
    )(x, w1p, b1p, w2p, b2)

    return out[:B]


def init_params(key):
    # Deterministic init mimicking nn.Linear's U(-1/sqrt(fan_in), 1/sqrt(fan_in)).
    k1, k2, k3, k4 = jax.random.split(key, 4)
    bound1 = 1.0 / jnp.sqrt(IN_DIM)
    bound2 = 1.0 / jnp.sqrt(HID)
    w1 = jax.random.uniform(k1, (IN_DIM, HID), jnp.float32, -bound1, bound1)
    b1 = jax.random.uniform(k2, (1, HID), jnp.float32, -bound1, bound1)
    w2 = jax.random.uniform(k3, (HID, OUT), jnp.float32, -bound2, bound2)
    b2 = jax.random.uniform(k4, (1, OUT), jnp.float32, -bound2, bound2)
    return w1, b1, w2, b2


if __name__ == "__main__":
    key = jax.random.PRNGKey(0)
    kx, kp = jax.random.split(key)
    B = 8
    x = jax.random.normal(kx, (B, IN_DIM), jnp.float32)
    w1, b1, w2, b2 = init_params(kp)

    # One-time param prep (padding + bf16 cast), hoisted out of the forward.
    w1p, b1p, w2p, b2p = prepare_params(w1, b1, w2, b2)

    out = net_forward(x, w1p, b1p, w2p, b2p)
    jax.block_until_ready(out)
    assert out.shape == (B, OUT)

    # Sanity check vs. a plain-JAX reference that uses the same bf16-operand /
    # f32-accumulate numerics as the kernel.
    h = jnp.dot(x.astype(jnp.bfloat16), w1.astype(jnp.bfloat16),
                preferred_element_type=jnp.float32) + b1
    h = jnp.maximum(h, 0.0)
    logits = jnp.dot(h.astype(jnp.bfloat16), w2.astype(jnp.bfloat16),
                     preferred_element_type=jnp.float32) + b2
    ref = jax.nn.log_softmax(logits, axis=1)
    assert jnp.max(jnp.abs(out - ref)) < 5e-3

    # Looser check vs. the pure-f32 reference (bf16 rounding bound).
    ref_f32 = jax.nn.log_softmax(jnp.maximum(x @ w1 + b1, 0.0) @ w2 + b2, axis=1)
    assert jnp.max(jnp.abs(out - ref_f32)) < 5e-2

    print("KERNEL_OK")
</pallas_src>

<mosaic_0001>
module attributes {stable_mosaic.version = 11 : i64} {
  func.func @net_kernel(%arg0: i32, %arg1: memref<8x192xf32, #tpu.memory_space<vmem>>, %arg2: memref<192x384xbf16, #tpu.memory_space<vmem>>, %arg3: memref<1x384xf32, #tpu.memory_space<vmem>>, %arg4: memref<384x9xbf16, #tpu.memory_space<vmem>>, %arg5: memref<1x9xf32, #tpu.memory_space<vmem>>, %arg6: memref<8x9xf32, #tpu.memory_space<vmem>>) attributes {dimension_semantics = [#tpu.dimension_semantics<parallel>], iteration_bounds = array<i64: 1>, scalar_prefetch = 0 : i64, scratch_operands = 0 : i64, tpu.core_type = #tpu.core_type<tc>, window_params = [{transform_indices = @transform_0, window_bounds = array<i64: 8, 192>}, {pipeline_mode = #tpu.pipeline_mode<synchronous>, transform_indices = @transform_1, window_bounds = array<i64: 192, 384>}, {pipeline_mode = #tpu.pipeline_mode<synchronous>, transform_indices = @transform_2, window_bounds = array<i64: 1, 384>}, {pipeline_mode = #tpu.pipeline_mode<synchronous>, transform_indices = @transform_3, window_bounds = array<i64: 384, 9>}, {pipeline_mode = #tpu.pipeline_mode<synchronous>, transform_indices = @transform_4, window_bounds = array<i64: 1, 9>}, {transform_indices = @transform_5, window_bounds = array<i64: 8, 9>}]} {
    %c0 = arith.constant 0 : index
    %c0_0 = arith.constant 0 : index
    %0 = vector.load %arg1[%c0, %c0_0] : memref<8x192xf32, #tpu.memory_space<vmem>>, vector<8x192xf32>
    %1 = arith.truncf %0 : vector<8x192xf32> to vector<8x192xbf16>
    %c0_1 = arith.constant 0 : index
    %c0_2 = arith.constant 0 : index
    %2 = vector.load %arg2[%c0_1, %c0_2] : memref<192x384xbf16, #tpu.memory_space<vmem>>, vector<192x384xbf16>
    %cst = arith.constant dense<0.000000e+00> : vector<8x384xf32>
    %3 = tpu.matmul %1, %2, %cst {dimension_numbers = #tpu.dot_dimension_numbers<[1], [0], [0], [1], [0, 0, 1, 1], [], []>} : vector<8x192xbf16>, vector<192x384xbf16>, vector<8x384xf32> -> vector<8x384xf32>
    %c0_3 = arith.constant 0 : index
    %c0_4 = arith.constant 0 : index
    %4 = vector.load %arg3[%c0_3, %c0_4] : memref<1x384xf32, #tpu.memory_space<vmem>>, vector<1x384xf32>
    %5 = vector.broadcast %4 : vector<1x384xf32> to vector<8x384xf32>
    %6 = arith.addf %3, %5 : vector<8x384xf32>
    %cst_5 = arith.constant 0.000000e+00 : f32
    %7 = vector.broadcast %cst_5 : f32 to vector<8x384xf32>
    %8 = arith.maximumf %6, %7 : vector<8x384xf32>
    %9 = arith.truncf %8 : vector<8x384xf32> to vector<8x384xbf16>
    %c0_6 = arith.constant 0 : index
    %c0_7 = arith.constant 0 : index
    %10 = vector.load %arg4[%c0_6, %c0_7] : memref<384x9xbf16, #tpu.memory_space<vmem>>, vector<384x9xbf16>
    %cst_8 = arith.constant dense<0.000000e+00> : vector<8x9xf32>
    %11 = tpu.matmul %9, %10, %cst_8 {dimension_numbers = #tpu.dot_dimension_numbers<[1], [0], [0], [1], [0, 0, 1, 1], [], []>} : vector<8x384xbf16>, vector<384x9xbf16>, vector<8x9xf32> -> vector<8x9xf32>
    %c0_9 = arith.constant 0 : index
    %c0_10 = arith.constant 0 : index
    %12 = vector.load %arg5[%c0_9, %c0_10] : memref<1x9xf32, #tpu.memory_space<vmem>>, vector<1x9xf32>
    %13 = vector.broadcast %12 : vector<1x9xf32> to vector<8x9xf32>
    %14 = arith.addf %11, %13 : vector<8x9xf32>
    %cst_11 = arith.constant dense<0xFF800000> : vector<8xf32>
    %15 = vector.multi_reduction <maximumf>, %14, %cst_11 [1] : vector<8x9xf32> to vector<8xf32>
    %16 = vector.shape_cast %15 : vector<8xf32> to vector<8x1xf32>
    %17 = vector.broadcast %16 : vector<8x1xf32> to vector<8x9xf32>
    %18 = arith.subf %14, %17 : vector<8x9xf32>
    %19 = math.exp %18 : vector<8x9xf32>
    %cst_12 = arith.constant dense<0.000000e+00> : vector<8xf32>
    %20 = vector.multi_reduction <add>, %19, %cst_12 [1] : vector<8x9xf32> to vector<8xf32>
    %21 = vector.shape_cast %20 : vector<8xf32> to vector<8x1xf32>
    %22 = math.log %21 : vector<8x1xf32>
    %23 = vector.broadcast %22 : vector<8x1xf32> to vector<8x9xf32>
    %24 = arith.subf %18, %23 : vector<8x9xf32>
    %c0_13 = arith.constant 0 : index
    %c0_14 = arith.constant 0 : index
    %25 = vector.load %arg6[%c0_13, %c0_14] : memref<8x9xf32, #tpu.memory_space<vmem>>, vector<8x9xf32>
    tpu.vector_store %arg6[%c0_13, %c0_14], %24 {strides = array<i32>} : memref<8x9xf32, #tpu.memory_space<vmem>>, vector<8x9xf32>,
    return
  }
  func.func @transform_0(%arg0: i32) -> (i32, i32) {
    %c0_i32 = arith.constant 0 : i32
    %c0_i32_0 = arith.constant 0 : i32
    return %arg0, %c0_i32 : i32, i32
  }
  func.func @transform_1(%arg0: i32) -> (i32, i32) {
    %c0_i32 = arith.constant 0 : i32
    %c0_i32_0 = arith.constant 0 : i32
    %c0_i32_1 = arith.constant 0 : i32
    return %c0_i32, %c0_i32_0 : i32, i32
  }
  func.func @transform_2(%arg0: i32) -> (i32, i32) {
    %c0_i32 = arith.constant 0 : i32
    %c0_i32_0 = arith.constant 0 : i32
    %c0_i32_1 = arith.constant 0 : i32
    return %c0_i32, %c0_i32_0 : i32, i32
  }
  func.func @transform_3(%arg0: i32) -> (i32, i32) {
    %c0_i32 = arith.constant 0 : i32
    %c0_i32_0 = arith.constant 0 : i32
    %c0_i32_1 = arith.constant 0 : i32
    return %c0_i32, %c0_i32_0 : i32, i32
  }
  func.func @transform_4(%arg0: i32) -> (i32, i32) {
    %c0_i32 = arith.constant 0 : i32
    %c0_i32_0 = arith.constant 0 : i32
    %c0_i32_1 = arith.constant 0 : i32
    return %c0_i32, %c0_i32_0 : i32, i32
  }
  func.func @transform_5(%arg0: i32) -> (i32, i32) {
    %c0_i32 = arith.constant 0 : i32
    %c0_i32_0 = arith.constant 0 : i32
    return %arg0, %c0_i32 : i32, i32
  }
}

</mosaic_0001>

<llo_original>
// kernel: net_forward.1
$region0: #{net_forward.1}
  #allocation0 [shape = 'u32[]', space=smem, size = 0x4, offset = 0x4, fixed_abs, tag = 'smem constant byte address 0x4 - core index']
  #allocation1 [shape = 'u32[72,128]{1,0:T(1,128)}', space=vmem, size = 0x9000, scoped, tag = 'internal scratch']
  %s0 = inlined_call_operand.vmem [shape: f32[8,192], index: 0, kind: input, shape index: {}]
  %s1 = inlined_call_operand.hbm [shape: bf16[192,384], index: 1, kind: input, shape index: {}]
  %s2 = inlined_call_operand.vmem [shape: f32[1,384], index: 2, kind: input, shape index: {}]
  %s3 = inlined_call_operand.vmem [shape: bf16[384,9], index: 3, kind: input, shape index: {}]
  %s4 = inlined_call_operand.vmem [shape: f32[1,9], index: 4, kind: input, shape index: {}]
  %s5 = inlined_call_operand.hbm [shape: f32[8,9], index: 5, kind: output, shape index: {}]
  %s6 = sld [smem:[#allocation0]]
  $region34: #{net_forward.1} parent=0
    _
  %s8 = ssub.s32 1, %s6
  %s9 = scalar_select 0, %s8, %s6
  $region1: #{net_forward.1} parent=0
    #allocation2 [shape = 'u8[147456]{0}', space=vmem, size = 0x24000, scoped, tag = 'input window, operand 1, single buffered']
    #allocation3 [shape = 's32[1]{0}', space=sflag, size = 0x4, scoped, tag = 'scoped memory for net_forward.1']
    #allocation4 [shape = 's32[1]{0}', space=sflag, size = 0x4, scoped, tag = 'scoped memory for net_forward.1']
    #allocation5 [shape = 'u8[4096]{0}', space=vmem, size = 0x1000, scoped, tag = 'output window, operand 0, single buffered']
    %10 = vsyncpa [#allocation3], 0
    %11 = vsyncpa [#allocation4], 0
    // Predicated region
    $region2: #{net_forward.1} parent=1 // pred_check
      _
    $region3: #{net_forward.1} parent=1 // pred_check_branch
      %13 = sbr.rel (0) target = $region5
    $region4: #{net_forward.1} parent=1 // pred_region
      _
    $region5: #{net_forward.1} parent=1 // pred_fallthru
      _
    // Predicated region
    $region6: #{net_forward.1} parent=1 // pred_check
      _
    $region7: #{net_forward.1} parent=1 // pred_check_branch
      %15 = sbr.rel (0) target = $region9
    $region8: #{net_forward.1} parent=1 // pred_region
      %17 = vsyncadd [#allocation3], 0
      %s18 = sshll.u32 %s1, 4
      %s19 = int_to_ptr.hbm [resolvable:$true] %s18
      %s20 = sshll.u32 [#allocation2], 4
      %s21 = int_to_ptr.vmem [resolvable:$true] %s20
      %26 = dma.hbm_to_vmem [thread:$0]  %s19, 4608, %s21, [#allocation3], 192, 192, 12
    $region9: #{net_forward.1} parent=1 // pred_fallthru
      _
    // Predicated region
    $region10: #{net_forward.1} parent=1 // pred_check
      _
    $region11: #{net_forward.1} parent=1 // pred_check_branch
      %28 = sbr.rel (0) target = $region13
    $region12: #{net_forward.1} parent=1 // pred_region
      _
    $region13: #{net_forward.1} parent=1 // pred_fallthru
      _
    // Predicated region
    $region14: #{net_forward.1} parent=1 // pred_check
      _
    $region15: #{net_forward.1} parent=1 // pred_check_branch
      %30 = sbr.rel (0) target = $region17
    $region16: #{net_forward.1} parent=1 // pred_region
      _
    $region17: #{net_forward.1} parent=1 // pred_fallthru
      _
    // Predicated region
    $region18: #{net_forward.1} parent=1 // pred_check
      _
    $region19: #{net_forward.1} parent=1 // pred_check_branch
      %32 = sbr.rel (0) target = $region21
    $region20: #{net_forward.1} parent=1 // pred_region
      _
    $region21: #{net_forward.1} parent=1 // pred_fallthru
      _
    // Predicated region
    $region22: #{net_forward.1} parent=1 // pred_check
      _
    $region23: #{net_forward.1} parent=1 // pred_check_branch
      %34 = sbr.rel (0) target = $region25
    $region24: #{net_forward.1} parent=1 // pred_region
      %36 = dma.done [#allocation3], 4608
    $region25: #{net_forward.1} parent=1 // pred_fallthru
      _
    %v38 = vld [vmem:[%s0] sm:$0xff]
    %v39 = vld [vmem:[%s0 + $0x8] sm:$0xff]
    %v40 = vpack.c.bf16 %v38, %v38
    %v41 = vpack.c.bf16 %v39, %v39
    %v42 = vld [vmem:[#allocation2] sm:$0xff]
    %v43 = vld [vmem:[#allocation2 + $0x8] sm:$0xf]
    %v44 = vld [vmem:[#allocation2 + $0xc] sm:$0xff]
    %v45 = vld [vmem:[#allocation2 + $0x14] sm:$0xf]
    %v46 = vld [vmem:[#allocation2 + $0x18] sm:$0xff]
    %v47 = vld [vmem:[#allocation2 + $0x20] sm:$0xf]
    %v48 = vld [vmem:[#allocation2 + $0x24] sm:$0xff]
    %v49 = vld [vmem:[#allocation2 + $0x2c] sm:$0xf]
    %v50 = vld [vmem:[#allocation2 + $0x30] sm:$0xff]
    %v51 = vld [vmem:[#allocation2 + $0x38] sm:$0xf]
    %v52 = vld [vmem:[#allocation2 + $0x3c] sm:$0xff]
    %v53 = vld [vmem:[#allocation2 + $0x44] sm:$0xf]
    %v54 = vld [vmem:[#allocation2 + $0x48] sm:$0xff]
    %v55 = vld [vmem:[#allocation2 + $0x50] sm:$0xf]
    %v56 = vld [vmem:[#allocation2 + $0x54] sm:$0xff]
    %v57 = vld [vmem:[#allocation2 + $0x5c] sm:$0xf]
    %v58 = vld [vmem:[#allocation2 + $0x60] sm:$0xff]
    %v59 = vld [vmem:[#allocation2 + $0x68] sm:$0xf]
    %v60 = vld [vmem:[#allocation2 + $0x6c] sm:$0xff]
    %v61 = vld [vmem:[#allocation2 + $0x74] sm:$0xf]
    %v62 = vld [vmem:[#allocation2 + $0x78] sm:$0xff]
    %v63 = vld [vmem:[#allocation2 + $0x80] sm:$0xf]
    %v64 = vld [vmem:[#allocation2 + $0x84] sm:$0xff]
    %v65 = vld [vmem:[#allocation2 + $0x8c] sm:$0xf]
    %v66 = vld [vmem:[#allocation2 + $0x90] sm:$0xff]
    %v67 = vld [vmem:[#allocation2 + $0x98] sm:$0xf]
    %v68 = vld [vmem:[#allocation2 + $0x9c] sm:$0xff]
    %v69 = vld [vmem:[#allocation2 + $0xa4] sm:$0xf]
    %v70 = vld [vmem:[#allocation2 + $0xa8] sm:$0xff]
    %v71 = vld [vmem:[#allocation2 + $0xb0] sm:$0xf]
    %v72 = vld [vmem:[#allocation2 + $0xb4] sm:$0xff]
    %v73 = vld [vmem:[#allocation2 + $0xbc] sm:$0xf]
    %v74 = vld [vmem:[#allocation2 + $0xc0] sm:$0xff]
    %v75 = vld [vmem:[#allocation2 + $0xc8] sm:$0xf]
    %v76 = vld [vmem:[#allocation2 + $0xcc] sm:$0xff]
    %v77 = vld [vmem:[#allocation2 + $0xd4] sm:$0xf]
    %v78 = vld [vmem:[#allocation2 + $0xd8] sm:$0xff]
    %v79 = vld [vmem:[#allocation2 + $0xe0] sm:$0xf]
    %v80 = vld [vmem:[#allocation2 + $0xe4] sm:$0xff]
    %v81 = vld [vmem:[#allocation2 + $0xec] sm:$0xf]
    %v82 = vld [vmem:[#allocation2 + $0xf0] sm:$0xff]
    %v83 = vld [vmem:[#allocation2 + $0xf8] sm:$0xf]
    %v84 = vld [vmem:[#allocation2 + $0xfc] sm:$0xff]
    %v85 = vld [vmem:[#allocation2 + $0x104] sm:$0xf]
    %v86 = vld [vmem:[#allocation2 + $0x108] sm:$0xff]
    %v87 = vld [vmem:[#allocation2 + $0x110] sm:$0xf]
    %v88 = vld [vmem:[#allocation2 + $0x114] sm:$0xff]
    %v89 = vld [vmem:[#allocation2 + $0x11c] sm:$0xf]
    %v90 = vld [vmem:[%s2] sm:$0x7]
    %v92 = vperm.slane %v90, 0
    %v93 = vperm.slane %v90, 1
    %v94 = vperm.slane %v90, 2
    %v146 = vunpack.c.l.b16 %v42
    %v147 = vunpack.c.h.b16 %v42
    %v148 = vunpack.c.l.b16 %v43
    %v149 = vunpack.c.l.b16 %v44
    %v150 = vunpack.c.h.b16 %v44
    %v151 = vunpack.c.l.b16 %v45
    %v152 = vunpack.c.l.b16 %v46
    %v153 = vunpack.c.h.b16 %v46
    %v154 = vunpack.c.l.b16 %v47
    %v155 = vunpack.c.l.b16 %v48
    %v156 = vunpack.c.h.b16 %v48
    %v157 = vunpack.c.l.b16 %v49
    %v158 = vunpack.c.l.b16 %v50
    %v159 = vunpack.c.h.b16 %v50
    %v160 = vunpack.c.l.b16 %v51
    %v161 = vunpack.c.l.b16 %v52
    %v162 = vunpack.c.h.b16 %v52
    %v163 = vunpack.c.l.b16 %v53
    %v164 = vunpack.c.l.b16 %v54
    %v165 = vunpack.c.h.b16 %v54
    %v166 = vunpack.c.l.b16 %v55
    %v167 = vunpack.c.l.b16 %v56
    %v168 = vunpack.c.h.b16 %v56
    %v169 = vunpack.c.l.b16 %v57
    %v170 = vunpack.c.l.b16 %v58
    %v171 = vunpack.c.h.b16 %v58
    %v172 = vunpack.c.l.b16 %v59
    %v173 = vunpack.c.l.b16 %v60
    %v174 = vunpack.c.h.b16 %v60
    %v175 = vunpack.c.l.b16 %v61
    %v176 = vunpack.c.l.b16 %v62
    %v177 = vunpack.c.h.b16 %v62
    %v178 = vunpack.c.l.b16 %v63
    %v179 = vunpack.c.l.b16 %v64
    %v180 = vunpack.c.h.b16 %v64
    %v181 = vunpack.c.l.b16 %v65
    %v182 = vunpack.c.l.b16 %v66
    %v183 = vunpack.c.h.b16 %v66
    %v184 = vunpack.c.l.b16 %v67
    %v185 = vunpack.c.l.b16 %v68
    %v186 = vunpack.c.h.b16 %v68
    %v187 = vunpack.c.l.b16 %v69
    %v188 = vunpack.c.l.b16 %v70
    %v189 = vunpack.c.h.b16 %v70
    %v190 = vunpack.c.l.b16 %v71
    %v191 = vunpack.c.l.b16 %v72
    %v192 = vunpack.c.h.b16 %v72
    %v193 = vunpack.c.l.b16 %v73
    %v194 = vunpack.c.l.b16 %v74
    %v195 = vunpack.c.h.b16 %v74
    %v196 = vunpack.c.l.b16 %v75
    %v197 = vunpack.c.l.b16 %v76
    %v198 = vunpack.c.h.b16 %v76
    %v199 = vunpack.c.l.b16 %v77
    %v200 = vunpack.c.l.b16 %v78
    %v201 = vunpack.c.h.b16 %v78
    %v202 = vunpack.c.l.b16 %v79
    %v203 = vunpack.c.l.b16 %v80
    %v204 = vunpack.c.h.b16 %v80
    %v205 = vunpack.c.l.b16 %v81
    %v206 = vunpack.c.l.b16 %v82
    %v207 = vunpack.c.h.b16 %v82
    %v208 = vunpack.c.l.b16 %v83
    %v209 = vunpack.c.l.b16 %v84
    %v210 = vunpack.c.h.b16 %v84
    %v211 = vunpack.c.l.b16 %v85
    %v212 = vunpack.c.l.b16 %v86
    %v213 = vunpack.c.h.b16 %v86
    %v214 = vunpack.c.l.b16 %v87
    %v215 = vunpack.c.l.b16 %v88
    %v216 = vunpack.c.h.b16 %v88
    %v217 = vunpack.c.l.b16 %v89
    %v218 = vpack.c.b16 %v149, %v146
    %v219 = vpack.c.b16 %v150, %v147
    %v220 = vpack.c.b16 %v151, %v148
    %v221 = vpack.c.b16 %v155, %v152
    %v222 = vpack.c.b16 %v156, %v153
    %v223 = vpack.c.b16 %v157, %v154
    %v224 = vpack.c.b16 %v161, %v158
    %v225 = vpack.c.b16 %v162, %v159
    %v226 = vpack.c.b16 %v163, %v160
    %v227 = vpack.c.b16 %v167, %v164
    %v228 = vpack.c.b16 %v168, %v165
    %v229 = vpack.c.b16 %v169, %v166
    %v230 = vpack.c.b16 %v173, %v170
    %v231 = vpack.c.b16 %v174, %v171
    %v232 = vpack.c.b16 %v175, %v172
    %v233 = vpack.c.b16 %v179, %v176
    %v234 = vpack.c.b16 %v180, %v177
    %v235 = vpack.c.b16 %v181, %v178
    %v236 = vpack.c.b16 %v185, %v182
    %v237 = vpack.c.b16 %v186, %v183
    %v238 = vpack.c.b16 %v187, %v184
    %v239 = vpack.c.b16 %v191, %v188
    %v240 = vpack.c.b16 %v192, %v189
    %v241 = vpack.c.b16 %v193, %v190
    %v242 = vpack.c.b16 %v197, %v194
    %v243 = vpack.c.b16 %v198, %v195
    %v244 = vpack.c.b16 %v199, %v196
    %v245 = vpack.c.b16 %v203, %v200
    %v246 = vpack.c.b16 %v204, %v201
    %v247 = vpack.c.b16 %v205, %v202
    %v248 = vpack.c.b16 %v209, %v206
    %v249 = vpack.c.b16 %v210, %v207
    %v250 = vpack.c.b16 %v211, %v208
    %v251 = vpack.c.b16 %v215, %v212
    %v252 = vpack.c.b16 %v216, %v213
    %v253 = vpack.c.b16 %v217, %v214
    %vm290 = vcmask 523264
    %v292 = vsel %vm290, %v41, 0
    %294 = vmatpush.bf16.msra.mxu0 %v239
    %295 = vmatpush.bf16.msra.mxu0 %v236
    %296 = vmatpush.bf16.msra.mxu0 %v233
    %297 = vmatpush.bf16.msra.mxu0 %v230
    %298 = vmatpush.bf16.msra.mxu0 %v227
    %299 = vmatpush.bf16.msra.mxu0 %v224
    %300 = vmatpush.bf16.msra.mxu0 %v221
    %301 = vmatpush.bf16.msra.mxu0 %v218
    %302 = vmatmul.bf16.gmra.mxu0 %v40
    %v303 = vpop.f32.mrf.mxu0
    %v304 = vadd.f32 %v92, %v303
    %v305 = vpop.f32.mrf.mxu0
    %306 = vdwg.mxu0
    %307 = vmatpush.bf16.msra.mxu0 0
    %308 = vmatpush.bf16.msra.mxu0 0
    %309 = vmatpush.bf16.msra.mxu0 0
    %310 = vmatpush.bf16.msra.mxu0 0
    %311 = vmatpush.bf16.msra.mxu0 %v251
    %312 = vmatpush.bf16.msra.mxu0 %v248
    %313 = vmatpush.bf16.msra.mxu0 %v245
    %314 = vmatpush.bf16.msra.mxu0 %v242
    %315 = vmatmul.bf16.gmra.mxu0 %v292
    %v316 = vpop.f32.mrf.mxu0
    %v317 = vadd.f32 %v304, %v316
    %v318 = vpop.f32.mrf.mxu0
    %319 = vdwg.mxu0
    %320 = vmatpush.bf16.msra.mxu0 %v240
    %321 = vmatpush.bf16.msra.mxu0 %v237
    %322 = vmatpush.bf16.msra.mxu0 %v234
    %323 = vmatpush.bf16.msra.mxu0 %v231
    %324 = vmatpush.bf16.msra.mxu0 %v228
    %325 = vmatpush.bf16.msra.mxu0 %v225
    %326 = vmatpush.bf16.msra.mxu0 %v222
    %327 = vmatpush.bf16.msra.mxu0 %v219
    %328 = vmatmul.bf16.gmra.mxu0 %v40
    %v329 = vpop.f32.mrf.mxu0
    %v330 = vadd.f32 %v93, %v329
    %v331 = vpop.f32.mrf.mxu0
    %332 = vdwg.mxu0
    %333 = vmatpush.bf16.msra.mxu0 0
    %334 = vmatpush.bf16.msra.mxu0 0
    %335 = vmatpush.bf16.msra.mxu0 0
    %336 = vmatpush.bf16.msra.mxu0 0
    %337 = vmatpush.bf16.msra.mxu0 %v252
    %338 = vmatpush.bf16.msra.mxu0 %v249
    %339 = vmatpush.bf16.msra.mxu0 %v246
    %340 = vmatpush.bf16.msra.mxu0 %v243
    %341 = vmatmul.bf16.gmra.mxu0 %v292
    %v342 = vpop.f32.mrf.mxu0
    %v343 = vadd.f32 %v330, %v342
    %v344 = vpop.f32.mrf.mxu0
    %345 = vdwg.mxu0
    %346 = vmatpush.bf16.msra.mxu0 %v241
    %347 = vmatpush.bf16.msra.mxu0 %v238
    %348 = vmatpush.bf16.msra.mxu0 %v235
    %349 = vmatpush.bf16.msra.mxu0 %v232
    %350 = vmatpush.bf16.msra.mxu0 %v229
    %351 = vmatpush.bf16.msra.mxu0 %v226
    %352 = vmatpush.bf16.msra.mxu0 %v223
    %353 = vmatpush.bf16.msra.mxu0 %v220
    %354 = vmatmul.bf16.gmra.mxu0 %v40
    %v355 = vpop.f32.mrf.mxu0
    %v356 = vadd.f32 %v94, %v355
    %v357 = vpop.f32.mrf.mxu0
    %358 = vdwg.mxu0
    %359 = vmatpush.bf16.msra.mxu0 0
    %360 = vmatpush.bf16.msra.mxu0 0
    %361 = vmatpush.bf16.msra.mxu0 0
    %362 = vmatpush.bf16.msra.mxu0 0
    %363 = vmatpush.bf16.msra.mxu0 %v253
    %364 = vmatpush.bf16.msra.mxu0 %v250
    %365 = vmatpush.bf16.msra.mxu0 %v247
    %366 = vmatpush.bf16.msra.mxu0 %v244
    %367 = vmatmul.bf16.gmra.mxu0 %v292
    %v368 = vpop.f32.mrf.mxu0
    %v369 = vadd.f32 %v356, %v368
    %v370 = vpop.f32.mrf.mxu0
    %371 = vdwg.mxu0
    %v372 = vmax.f32 %v317, 0.0
    %v373 = vmax.f32 %v343, 0.0
    %v374 = vmax.f32 %v369, 0.0
    %v375 = vpack.c.bf16 %v372, %v372
    %v376 = vpack.c.bf16 %v373, %v373
    %v377 = vpack.c.bf16 %v374, %v374
    %v378 = vld [vmem:[%s3] sm:$0xf]
    %v379 = vld [vmem:[%s3 + $0x4] sm:$0xf]
    %v380 = vld [vmem:[%s3 + $0x8] sm:$0xf]
    %v381 = vld [vmem:[%s3 + $0xc] sm:$0xf]
    %v382 = vld [vmem:[%s3 + $0x10] sm:$0xf]
    %v383 = vld [vmem:[%s3 + $0x14] sm:$0xf]
    %v384 = vld [vmem:[%s3 + $0x18] sm:$0xf]
    %v385 = vld [vmem:[%s3 + $0x1c] sm:$0xf]
    %v386 = vld [vmem:[%s3 + $0x20] sm:$0xf]
    %v387 = vld [vmem:[%s3 + $0x24] sm:$0xf]
    %v388 = vld [vmem:[%s3 + $0x28] sm:$0xf]
    %v389 = vld [vmem:[%s3 + $0x2c] sm:$0xf]
    %v390 = vld [vmem:[%s3 + $0x30] sm:$0xf]
    %v391 = vld [vmem:[%s3 + $0x34] sm:$0xf]
    %v392 = vld [vmem:[%s3 + $0x38] sm:$0xf]
    %v393 = vld [vmem:[%s3 + $0x3c] sm:$0xf]
    %v394 = vld [vmem:[%s3 + $0x40] sm:$0xf]
    %v395 = vld [vmem:[%s3 + $0x44] sm:$0xf]
    %v396 = vld [vmem:[%s3 + $0x48] sm:$0xf]
    %v397 = vld [vmem:[%s3 + $0x4c] sm:$0xf]
    %v398 = vld [vmem:[%s3 + $0x50] sm:$0xf]
    %v399 = vld [vmem:[%s3 + $0x54] sm:$0xf]
    %v400 = vld [vmem:[%s3 + $0x58] sm:$0xf]
    %v401 = vld [vmem:[%s3 + $0x5c] sm:$0xf]
    %v402 = vld [vmem:[%s3 + $0x60] sm:$0xf]
    %v403 = vld [vmem:[%s3 + $0x64] sm:$0xf]
    %v404 = vld [vmem:[%s3 + $0x68] sm:$0xf]
    %v405 = vld [vmem:[%s3 + $0x6c] sm:$0xf]
    %v406 = vld [vmem:[%s3 + $0x70] sm:$0xf]
    %v407 = vld [vmem:[%s3 + $0x74] sm:$0xf]
    %v408 = vld [vmem:[%s3 + $0x78] sm:$0xf]
    %v409 = vld [vmem:[%s3 + $0x7c] sm:$0xf]
    %v410 = vld [vmem:[%s3 + $0x80] sm:$0xf]
    %v411 = vld [vmem:[%s3 + $0x84] sm:$0xf]
    %v412 = vld [vmem:[%s3 + $0x88] sm:$0xf]
    %v413 = vld [vmem:[%s3 + $0x8c] sm:$0xf]
    %v414 = vld [vmem:[%s3 + $0x90] sm:$0xf]
    %v415 = vld [vmem:[%s3 + $0x94] sm:$0xf]
    %v416 = vld [vmem:[%s3 + $0x98] sm:$0xf]
    %v417 = vld [vmem:[%s3 + $0x9c] sm:$0xf]
    %v418 = vld [vmem:[%s3 + $0xa0] sm:$0xf]
    %v419 = vld [vmem:[%s3 + $0xa4] sm:$0xf]
    %v420 = vld [vmem:[%s3 + $0xa8] sm:$0xf]
    %v421 = vld [vmem:[%s3 + $0xac] sm:$0xf]
    %v422 = vld [vmem:[%s3 + $0xb0] sm:$0xf]
    %v423 = vld [vmem:[%s3 + $0xb4] sm:$0xf]
    %v424 = vld [vmem:[%s3 + $0xb8] sm:$0xf]
    %v425 = vld [vmem:[%s3 + $0xbc] sm:$0xf]
    %v426 = vld [vmem:[%s4] sm:$0x1]
    %v428 = vperm.slane %v426, 0
    %v478 = vunpack.c.l.b16 %v378
    %v479 = vunpack.c.l.b16 %v379
    %v480 = vunpack.c.l.b16 %v380
    %v481 = vunpack.c.l.b16 %v381
    %v482 = vunpack.c.l.b16 %v382
    %v483 = vunpack.c.l.b16 %v383
    %v484 = vunpack.c.l.b16 %v384
    %v485 = vunpack.c.l.b16 %v385
    %v486 = vunpack.c.l.b16 %v386
    %v487 = vunpack.c.l.b16 %v387
    %v488 = vunpack.c.l.b16 %v388
    %v489 = vunpack.c.l.b16 %v389
    %v490 = vunpack.c.l.b16 %v390
    %v491 = vunpack.c.l.b16 %v391
    %v492 = vunpack.c.l.b16 %v392
    %v493 = vunpack.c.l.b16 %v393
    %v494 = vunpack.c.l.b16 %v394
    %v495 = vunpack.c.l.b16 %v395
    %v496 = vunpack.c.l.b16 %v396
    %v497 = vunpack.c.l.b16 %v397
    %v498 = vunpack.c.l.b16 %v398
    %v499 = vunpack.c.l.b16 %v399
    %v500 = vunpack.c.l.b16 %v400
    %v501 = vunpack.c.l.b16 %v401
    %v502 = vunpack.c.l.b16 %v402
    %v503 = vunpack.c.l.b16 %v403
    %v504 = vunpack.c.l.b16 %v404
    %v505 = vunpack.c.l.b16 %v405
    %v506 = vunpack.c.l.b16 %v406
    %v507 = vunpack.c.l.b16 %v407
    %v508 = vunpack.c.l.b16 %v408
    %v509 = vunpack.c.l.b16 %v409
    %v510 = vunpack.c.l.b16 %v410
    %v511 = vunpack.c.l.b16 %v411
    %v512 = vunpack.c.l.b16 %v412
    %v513 = vunpack.c.l.b16 %v413
    %v514 = vunpack.c.l.b16 %v414
    %v515 = vunpack.c.l.b16 %v415
    %v516 = vunpack.c.l.b16 %v416
    %v517 = vunpack.c.l.b16 %v417
    %v518 = vunpack.c.l.b16 %v418
    %v519 = vunpack.c.l.b16 %v419
    %v520 = vunpack.c.l.b16 %v420
    %v521 = vunpack.c.l.b16 %v421
    %v522 = vunpack.c.l.b16 %v422
    %v523 = vunpack.c.l.b16 %v423
    %v524 = vunpack.c.l.b16 %v424
    %v525 = vunpack.c.l.b16 %v425
    %v526 = vpack.c.b16 %v479, %v478
    %v527 = vpack.c.b16 %v481, %v480
    %v528 = vpack.c.b16 %v483, %v482
    %v529 = vpack.c.b16 %v485, %v484
    %v530 = vpack.c.b16 %v487, %v486
    %v531 = vpack.c.b16 %v489, %v488
    %v532 = vpack.c.b16 %v491, %v490
    %v533 = vpack.c.b16 %v493, %v492
    %v534 = vpack.c.b16 %v495, %v494
    %v535 = vpack.c.b16 %v497, %v496
    %v536 = vpack.c.b16 %v499, %v498
    %v537 = vpack.c.b16 %v501, %v500
    %v538 = vpack.c.b16 %v503, %v502
    %v539 = vpack.c.b16 %v505, %v504
    %v540 = vpack.c.b16 %v507, %v506
    %v541 = vpack.c.b16 %v509, %v508
    %v542 = vpack.c.b16 %v511, %v510
    %v543 = vpack.c.b16 %v513, %v512
    %v544 = vpack.c.b16 %v515, %v514
    %v545 = vpack.c.b16 %v517, %v516
    %v546 = vpack.c.b16 %v519, %v518
    %v547 = vpack.c.b16 %v521, %v520
    %v548 = vpack.c.b16 %v523, %v522
    %v549 = vpack.c.b16 %v525, %v524
    %574 = vmatpush.bf16.msra.mxu0 %v533
    %575 = vmatpush.bf16.msra.mxu0 %v532
    %576 = vmatpush.bf16.msra.mxu0 %v531
    %577 = vmatpush.bf16.msra.mxu0 %v530
    %578 = vmatpush.bf16.msra.mxu0 %v529
    %579 = vmatpush.bf16.msra.mxu0 %v528
    %580 = vmatpush.bf16.msra.mxu0 %v527
    %581 = vmatpush.bf16.msra.mxu0 %v526
    %582 = vmatmul.bf16.gmra.mxu0 %v375
    %v583 = vpop.f32.mrf.mxu0
    %v584 = vadd.f32 %v428, %v583
    %v585 = vpop.f32.mrf.mxu0
    %586 = vdwg.mxu0
    %587 = vmatpush.bf16.msra.mxu0 %v541
    %588 = vmatpush.bf16.msra.mxu0 %v540
    %589 = vmatpush.bf16.msra.mxu0 %v539
    %590 = vmatpush.bf16.msra.mxu0 %v538
    %591 = vmatpush.bf16.msra.mxu0 %v537
    %592 = vmatpush.bf16.msra.mxu0 %v536
    %593 = vmatpush.bf16.msra.mxu0 %v535
    %594 = vmatpush.bf16.msra.mxu0 %v534
    %595 = vmatmul.bf16.gmra.mxu0 %v376
    %v596 = vpop.f32.mrf.mxu0
    %v597 = vadd.f32 %v584, %v596
    %v598 = vpop.f32.mrf.mxu0
    %599 = vdwg.mxu0
    %600 = vmatpush.bf16.msra.mxu0 %v549
    %601 = vmatpush.bf16.msra.mxu0 %v548
    %602 = vmatpush.bf16.msra.mxu0 %v547
    %603 = vmatpush.bf16.msra.mxu0 %v546
    %604 = vmatpush.bf16.msra.mxu0 %v545
    %605 = vmatpush.bf16.msra.mxu0 %v544
    %606 = vmatpush.bf16.msra.mxu0 %v543
    %607 = vmatpush.bf16.msra.mxu0 %v542
    %608 = vmatmul.bf16.gmra.mxu0 %v377
    %v609 = vpop.f32.mrf.mxu0
    %v610 = vadd.f32 %v597, %v609
    %v611 = vpop.f32.mrf.mxu0
    %612 = vdwg.mxu0
    %vm613 = vcmask 72704
    %v614 = vsel %vm613, %v610, -inf
    %615 = vmax.xlane.f32.xlu0 %v614
    %v616 = vpop.xlane.xlu0 %615
    %v617 = vsub.f32 %v610, %v616
    %v618 = vmul.f32 %v617, 1.442695
    %v619 = vpow.pop %v618
    %v620 = vsel %vm613, %v619, 0.0
    %621 = vadd.xlane.f32.xlu0 %v620
    %v622 = vpop.xlane.xlu0 %621
    %v623 = vlog2.pop %v622
    %v624 = vmul.f32 %v623, 0.6931472
    %v625 = vsub.f32 %v617, %v624
    %626 = vst.msk [vmem:[#allocation5] sm:$0xff] %vm613, %v625
    // Predicated region
    $region26: #{net_forward.1} parent=1 // pred_check
      _
    $region27: #{net_forward.1} parent=1 // pred_check_branch
      %628 = sbr.rel (0) target = $region29
    $region28: #{net_forward.1} parent=1 // pred_region
      %630 = vsyncadd [#allocation4], 0
      %s632 = sshll.u32 [#allocation5], 4
      %s633 = int_to_ptr.vmem [resolvable:$true] %s632
      %s634 = sshll.u32 %s5, 4
      %s635 = int_to_ptr.hbm [resolvable:$true] %s634
      %637 = dma.vmem_to_hbm [thread:$0]  %s633, 128, %s635, [#allocation4]
    $region29: #{net_forward.1} parent=1 // pred_fallthru
      _
    // Predicated region
    $region30: #{net_forward.1} parent=1 // pred_check
      _
    $region31: #{net_forward.1} parent=1 // pred_check_branch
      %639 = sbr.rel (0) target = $region33
    $region32: #{net_forward.1} parent=1 // pred_region
      %641 = dma.done [#allocation4], 128
    $region33: #{net_forward.1} parent=1 // pred_fallthru
      _
    %642 = vsyncpa [#allocation3], 1
    %643 = vsyncpa [#allocation4], 1

</llo_original>
